<compile_context>
chip_gen: v7x
topology: tpu7x:2x2x1
jax: 0.10.0
libtpu: 0.0.40
codegen_flags: <defaults>
</compile_context>

<pallas_src>
import functools

import jax
import jax.numpy as jnp
from jax.experimental import pallas as pl
from jax.experimental.pallas import tpu as pltpu


def _round_up(x, m):
    return ((x + m - 1) // m) * m


def _sign_network_kernel(x_ref, w1_ref, b1_ref, w2_ref, b2_ref,
                         w3_ref, b3_ref, o_ref, *, compute_dtype):
    """One batch tile: x_ref is (n_inputs, TB), batch on lanes."""
    cd = compute_dtype

    # Layer 1 (MXU): operands stay in their HBM dtype (bf16 fast path -> no
    # whole-tile upcast), accumulate in f32, add f32 bias.
    z1 = jnp.dot(w1_ref[...], x_ref[...],
                 preferred_element_type=jnp.float32) + b1_ref[...]
    # cos in the compute dtype (bf16 EUP/VPU on v6e/v7x, f32 elsewhere/when
    # requested); result feeds the next MXU pass directly.
    h1 = jnp.cos(z1.astype(cd))

    # Layer 2 (MXU): bf16 x bf16 -> f32 accumulate, f32 bias.
    z2 = jnp.dot(w2_ref[...], h1,
                 preferred_element_type=jnp.float32) + b2_ref[...]
    h2 = jnp.tanh(z2.astype(cd))

    # Output layer: (1,H) . (H,TB) done as VPU broadcast-multiply + sublane
    # reduction in f32 (keeps the trivial M=1 layer off the MXU).
    logits = jnp.sum(w3_ref[...] * h2.astype(jnp.float32),
                     axis=0, keepdims=True) + b3_ref[...]
    o_ref[...] = jax.nn.sigmoid(logits).astype(o_ref.dtype)


def sign_network_forward(x, params, *, batch_tile=32768,
                         compute_dtype=jnp.bfloat16,
                         x_is_feature_major=False):
    """Full sign_Network forward in one Pallas kernel.

    x:       (B, n_inputs) float32   -- or (n_inputs, B) already in
             `compute_dtype` if x_is_feature_major=True (skips the wrapper
             transpose/cast HBM round-trip of the only large stream).
    params:  dict with w1 (n_inputs,H), b1 (1,H), w2 (H,H), b2 (1,H),
             w3 (H,1), b3 (1,1)  (torch-Linear-equivalent (in,out) layout)
    returns: (B, 1) float32
    """
    if x_is_feature_major:
        n_in, B = x.shape
    else:
        B, n_in = x.shape
    H = params["w1"].shape[1]

    # ---- parameter layout (feature-major: (out_features, in_features)) ----
    # w1/w2 match the compute dtype so the MXU sees bf16 operands directly on
    # the fast path; biases, w3 and all accumulation stay f32.
    w1 = params["w1"].T.astype(compute_dtype)              # (H, n_in)
    b1 = params["b1"].reshape(H, 1).astype(jnp.float32)
    w2 = params["w2"].T.astype(compute_dtype)              # (H, H)
    b2 = params["b2"].reshape(H, 1).astype(jnp.float32)
    w3 = params["w3"].reshape(H, 1).astype(jnp.float32)    # (H, 1)
    b3 = params["b3"].reshape(1, 1).astype(jnp.float32)

    # ---- batch tiling ------------------------------------------------------
    B_lane = _round_up(B, 128)
    TB = min(int(batch_tile), B_lane)
    TB = _round_up(TB, 128)
    B_pad = _round_up(B, TB)
    # Keep >= 2 grid steps when the batch allows it (lets the "parallel" axis
    # feed both v7x TensorCores instead of idling one on a single giant tile).
    if B_pad // TB < 2 and TB >= 256 and TB % 256 == 0:
        TB //= 2
        B_pad = _round_up(B, TB)
    num_tiles = B_pad // TB

    # ---- x in feature-major layout, padded along batch ---------------------
    if x_is_feature_major:
        x_fm = x.astype(compute_dtype)
        if x_fm.shape[1] != B_pad:
            x_fm = jnp.pad(x_fm, ((0, 0), (0, B_pad - x_fm.shape[1])))
    else:
        # transpose+pad+convert is one fused XLA copy of the input stream.
        x_fm = jnp.pad(x.T, ((0, 0), (0, B_pad - B))).astype(compute_dtype)

    param_bytes = int(w1.size * w1.dtype.itemsize + w2.size * w2.dtype.itemsize
                      + (b1.size + b2.size + w3.size + b3.size) * 4)
    cost = pl.CostEstimate(
        flops=int(2 * B_pad * (n_in * H + H * H + H)),
        transcendentals=int(B_pad * (2 * H + 1)),           # cos + tanh + sigmoid
        bytes_accessed=int(x_fm.size * x_fm.dtype.itemsize
                           + B_pad * 4 + param_bytes),
    )

    # Weights/biases: full blocks, constant index_map -> VMEM-resident across
    # grid steps (only x and the output stream through HBM).
    const = lambda a: pl.BlockSpec(a.shape, lambda i: (0, 0))

    kernel = functools.partial(_sign_network_kernel, compute_dtype=compute_dtype)

    out = pl.pallas_call(
        kernel,
        out_shape=jax.ShapeDtypeStruct((1, B_pad), jnp.float32),
        grid_spec=pltpu.PrefetchScalarGridSpec(
            num_scalar_prefetch=0,
            grid=(num_tiles,),
            in_specs=[pl.BlockSpec((n_in, TB), lambda i: (0, i)),   # x tile
                      const(w1), const(b1),
                      const(w2), const(b2),
                      const(w3), const(b3)],
            out_specs=pl.BlockSpec((1, TB), lambda i: (0, i)),      # lane-dense
        ),
        compiler_params=pltpu.CompilerParams(
            dimension_semantics=("parallel",),          # batch axis -> 2x TC on v7x
            vmem_limit_bytes=32 * 1024 * 1024),         # safe on v5e/v6e/v7x
        cost_estimate=cost,
    )(x_fm, w1, b1, w2, b2, w3, b3)

    # Back to the module's (B, 1) convention; drop batch padding.
    return out[:, :B].T


def init_params(key, n_inputs, hidden):
    """Deterministic synthetic init (shapes match torch Linear layers)."""
    k1, k2, k3, k4, k5, k6 = jax.random.split(key, 6)
    s1 = 1.0 / jnp.sqrt(n_inputs)
    s2 = 1.0 / jnp.sqrt(hidden)
    return {
        "w1": jax.random.uniform(k1, (n_inputs, hidden), jnp.float32, -s1, s1),
        "b1": jax.random.uniform(k2, (1, hidden), jnp.float32, -s1, s1),
        "w2": jax.random.uniform(k3, (hidden, hidden), jnp.float32, -s2, s2),
        "b2": jax.random.uniform(k4, (1, hidden), jnp.float32, -s2, s2),
        "w3": jax.random.uniform(k5, (hidden, 1), jnp.float32, -s2, s2),
        "b3": jax.random.uniform(k6, (1, 1), jnp.float32, -s2, s2),
    }


def reference_forward(x, p, compute_dtype=jnp.float32):
    """Pure-JAX reference; with compute_dtype=bf16 it mirrors the kernel's
    rounding points (bf16 operands into matmuls, bf16 transcendental args)."""
    cd = compute_dtype
    f32 = jnp.float32
    z1 = x.astype(cd).astype(f32) @ p["w1"].astype(cd).astype(f32) + p["b1"]
    h1 = jnp.cos(z1.astype(cd))
    z2 = h1.astype(f32) @ p["w2"].astype(cd).astype(f32) + p["b2"]
    h2 = jnp.tanh(z2.astype(cd)).astype(f32)
    return jax.nn.sigmoid(h2 @ p["w3"] + p["b3"])


if __name__ == "__main__":
    key = jax.random.PRNGKey(0)
    kx, kp = jax.random.split(key)

    batch = 300          # non-multiple of 128 -> exercises padding/slicing
    n_inputs = 8
    H_s = 32

    x = jax.random.normal(kx, (batch, n_inputs), dtype=jnp.float32)
    params = init_params(kp, n_inputs, H_s)

    # 1) f32 accuracy path with a small batch tile (multi-step grid, weights
    #    VMEM-resident across steps).  Tolerance covers TPU default-precision
    #    MXU and EUP transcendental approximations vs XLA's reference.
    out_f32 = sign_network_forward(x, params, batch_tile=128,
                                   compute_dtype=jnp.float32)
    out_f32 = jax.block_until_ready(out_f32)
    ref_f32 = reference_forward(x, params, compute_dtype=jnp.float32)
    assert out_f32.shape == (batch, 1)
    assert jnp.allclose(out_f32, ref_f32, atol=3e-3, rtol=3e-3), \
        "mismatch vs reference (f32 path)"

    # 2) default perf path: bf16 HBM stream + bf16 transcendental chain,
    #    f32 accumulation; compared against a bf16-rounding-aware reference.
    out_bf16 = sign_network_forward(x, params)
    out_bf16 = jax.block_until_ready(out_bf16)
    ref_bf16 = reference_forward(x, params, compute_dtype=jnp.bfloat16)
    assert out_bf16.shape == (batch, 1)
    assert jnp.allclose(out_bf16, ref_bf16, atol=8e-3, rtol=8e-3), \
        "mismatch vs reference (bf16 path)"

    # 3) feature-major producer path: x already (n_in, B) in bf16 -> no
    #    wrapper-side transpose/cast round-trip of the large stream.
    x_fm = x.T.astype(jnp.bfloat16)
    out_fm = sign_network_forward(x_fm, params, x_is_feature_major=True)
    out_fm = jax.block_until_ready(out_fm)
    assert out_fm.shape == (batch, 1)
    assert jnp.allclose(out_fm, ref_bf16, atol=8e-3, rtol=8e-3), \
        "mismatch vs reference (feature-major bf16 path)"

    print("KERNEL_OK")
</pallas_src>

<mosaic_0001>
module attributes {stable_mosaic.version = 11 : i64} {
  func.func @_sign_network_kernel(%arg0: i32, %arg1: memref<8x128xf32, #tpu.memory_space<vmem>>, %arg2: memref<32x8xf32, #tpu.memory_space<vmem>>, %arg3: memref<32x1xf32, #tpu.memory_space<vmem>>, %arg4: memref<32x32xf32, #tpu.memory_space<vmem>>, %arg5: memref<32x1xf32, #tpu.memory_space<vmem>>, %arg6: memref<32x1xf32, #tpu.memory_space<vmem>>, %arg7: memref<1x1xf32, #tpu.memory_space<vmem>>, %arg8: memref<1x128xf32, #tpu.memory_space<vmem>>) attributes {dimension_semantics = [#tpu.dimension_semantics<parallel>], iteration_bounds = array<i64: 3>, scalar_prefetch = 0 : i64, scratch_operands = 0 : i64, tpu.core_type = #tpu.core_type<tc>, window_params = [{transform_indices = @transform_0, window_bounds = array<i64: 8, 128>}, {pipeline_mode = #tpu.pipeline_mode<synchronous>, transform_indices = @transform_1, window_bounds = array<i64: 32, 8>}, {pipeline_mode = #tpu.pipeline_mode<synchronous>, transform_indices = @transform_2, window_bounds = array<i64: 32, 1>}, {pipeline_mode = #tpu.pipeline_mode<synchronous>, transform_indices = @transform_3, window_bounds = array<i64: 32, 32>}, {pipeline_mode = #tpu.pipeline_mode<synchronous>, transform_indices = @transform_4, window_bounds = array<i64: 32, 1>}, {pipeline_mode = #tpu.pipeline_mode<synchronous>, transform_indices = @transform_5, window_bounds = array<i64: 32, 1>}, {pipeline_mode = #tpu.pipeline_mode<synchronous>, transform_indices = @transform_6, window_bounds = array<i64: 1, 1>}, {transform_indices = @transform_7, window_bounds = array<i64: 1, 128>}]} {
    %c0 = arith.constant 0 : index
    %c0_0 = arith.constant 0 : index
    %0 = vector.load %arg2[%c0, %c0_0] : memref<32x8xf32, #tpu.memory_space<vmem>>, vector<32x8xf32>
    %c0_1 = arith.constant 0 : index
    %c0_2 = arith.constant 0 : index
    %1 = vector.load %arg1[%c0_1, %c0_2] : memref<8x128xf32, #tpu.memory_space<vmem>>, vector<8x128xf32>
    %cst = arith.constant dense<0.000000e+00> : vector<32x128xf32>
    %2 = tpu.matmul %0, %1, %cst {dimension_numbers = #tpu.dot_dimension_numbers<[1], [0], [0], [1], [0, 0, 1, 1], [], []>} : vector<32x8xf32>, vector<8x128xf32>, vector<32x128xf32> -> vector<32x128xf32>
    %c0_3 = arith.constant 0 : index
    %c0_4 = arith.constant 0 : index
    %3 = vector.load %arg3[%c0_3, %c0_4] : memref<32x1xf32, #tpu.memory_space<vmem>>, vector<32x1xf32>
    %4 = vector.broadcast %3 : vector<32x1xf32> to vector<32x128xf32>
    %5 = arith.addf %2, %4 : vector<32x128xf32>
    %6 = math.cos %5 : vector<32x128xf32>
    %c0_5 = arith.constant 0 : index
    %c0_6 = arith.constant 0 : index
    %7 = vector.load %arg4[%c0_5, %c0_6] : memref<32x32xf32, #tpu.memory_space<vmem>>, vector<32x32xf32>
    %cst_7 = arith.constant dense<0.000000e+00> : vector<32x128xf32>
    %8 = tpu.matmul %7, %6, %cst_7 {dimension_numbers = #tpu.dot_dimension_numbers<[1], [0], [0], [1], [0, 0, 1, 1], [], []>} : vector<32x32xf32>, vector<32x128xf32>, vector<32x128xf32> -> vector<32x128xf32>
    %c0_8 = arith.constant 0 : index
    %c0_9 = arith.constant 0 : index
    %9 = vector.load %arg5[%c0_8, %c0_9] : memref<32x1xf32, #tpu.memory_space<vmem>>, vector<32x1xf32>
    %10 = vector.broadcast %9 : vector<32x1xf32> to vector<32x128xf32>
    %11 = arith.addf %8, %10 : vector<32x128xf32>
    %12 = math.tanh %11 : vector<32x128xf32>
    %c0_10 = arith.constant 0 : index
    %c0_11 = arith.constant 0 : index
    %13 = vector.load %arg6[%c0_10, %c0_11] : memref<32x1xf32, #tpu.memory_space<vmem>>, vector<32x1xf32>
    %14 = vector.broadcast %13 : vector<32x1xf32> to vector<32x128xf32>
    %15 = arith.mulf %14, %12 : vector<32x128xf32>
    %cst_12 = arith.constant dense<0.000000e+00> : vector<128xf32>
    %16 = vector.multi_reduction <add>, %15, %cst_12 [0] : vector<32x128xf32> to vector<128xf32>
    %17 = vector.shape_cast %16 : vector<128xf32> to vector<1x128xf32>
    %c0_13 = arith.constant 0 : index
    %c0_14 = arith.constant 0 : index
    %18 = vector.load %arg7[%c0_13, %c0_14] : memref<1x1xf32, #tpu.memory_space<vmem>>, vector<1x1xf32>
    %19 = vector.broadcast %18 : vector<1x1xf32> to vector<1x128xf32>
    %20 = arith.addf %17, %19 : vector<1x128xf32>
    %21 = arith.negf %20 : vector<1x128xf32>
    %22 = math.exp %21 : vector<1x128xf32>
    %cst_15 = arith.constant 1.000000e+00 : f32
    %23 = vector.broadcast %cst_15 : f32 to vector<1x128xf32>
    %24 = arith.addf %23, %22 : vector<1x128xf32>
    %25 = arith.divf %23, %24 : vector<1x128xf32>
    %c0_16 = arith.constant 0 : index
    %c0_17 = arith.constant 0 : index
    %26 = vector.load %arg8[%c0_16, %c0_17] : memref<1x128xf32, #tpu.memory_space<vmem>>, vector<1x128xf32>
    tpu.vector_store %arg8[%c0_16, %c0_17], %25 {strides = array<i32>} : memref<1x128xf32, #tpu.memory_space<vmem>>, vector<1x128xf32>,
    return
  }
  func.func @transform_0(%arg0: i32) -> (i32, i32) {
    %c0_i32 = arith.constant 0 : i32
    %c0_i32_0 = arith.constant 0 : i32
    return %c0_i32, %arg0 : i32, i32
  }
  func.func @transform_1(%arg0: i32) -> (i32, i32) {
    %c0_i32 = arith.constant 0 : i32
    %c0_i32_0 = arith.constant 0 : i32
    %c0_i32_1 = arith.constant 0 : i32
    return %c0_i32, %c0_i32_0 : i32, i32
  }
  func.func @transform_2(%arg0: i32) -> (i32, i32) {
    %c0_i32 = arith.constant 0 : i32
    %c0_i32_0 = arith.constant 0 : i32
    %c0_i32_1 = arith.constant 0 : i32
    return %c0_i32, %c0_i32_0 : i32, i32
  }
  func.func @transform_3(%arg0: i32) -> (i32, i32) {
    %c0_i32 = arith.constant 0 : i32
    %c0_i32_0 = arith.constant 0 : i32
    %c0_i32_1 = arith.constant 0 : i32
    return %c0_i32, %c0_i32_0 : i32, i32
  }
  func.func @transform_4(%arg0: i32) -> (i32, i32) {
    %c0_i32 = arith.constant 0 : i32
    %c0_i32_0 = arith.constant 0 : i32
    %c0_i32_1 = arith.constant 0 : i32
    return %c0_i32, %c0_i32_0 : i32, i32
  }
  func.func @transform_5(%arg0: i32) -> (i32, i32) {
    %c0_i32 = arith.constant 0 : i32
    %c0_i32_0 = arith.constant 0 : i32
    %c0_i32_1 = arith.constant 0 : i32
    return %c0_i32, %c0_i32_0 : i32, i32
  }
  func.func @transform_6(%arg0: i32) -> (i32, i32) {
    %c0_i32 = arith.constant 0 : i32
    %c0_i32_0 = arith.constant 0 : i32
    %c0_i32_1 = arith.constant 0 : i32
    return %c0_i32, %c0_i32_0 : i32, i32
  }
  func.func @transform_7(%arg0: i32) -> (i32, i32) {
    %c0_i32 = arith.constant 0 : i32
    %c0_i32_0 = arith.constant 0 : i32
    return %c0_i32, %arg0 : i32, i32
  }
}

</mosaic_0001>

<llo_original>
// kernel: tpu_custom_call.1
$region0: #{tpu_custom_call.1}
  #allocation0 [shape = 'u32[]', space=smem, size = 0x4, offset = 0x4, fixed_abs, tag = 'smem constant byte address 0x4 - core index']
  #allocation1 [shape = 'u32[144,128]{1,0:T(1,128)}', space=vmem, size = 0x12000, scoped, tag = 'internal scratch']
  #allocation2 [shape = 'f32[1,1]{1,0:T(1,128)S(1)}', space=vmem, size = 0x200, scoped, tag = 'scoped memory for tpu_custom_call.1']
  %s0 = inlined_call_operand.vmem [shape: f32[8,384], index: 0, kind: input, shape index: {}]
  %s1 = inlined_call_operand.vmem [shape: f32[32,8], index: 1, kind: input, shape index: {}]
  %s2 = inlined_call_operand.vmem [shape: f32[32,1], index: 2, kind: input, shape index: {}]
  %s3 = inlined_call_operand.vmem [shape: f32[32,32], index: 3, kind: input, shape index: {}]
  %s4 = inlined_call_operand.vmem [shape: f32[32,1], index: 4, kind: input, shape index: {}]
  %s5 = inlined_call_operand.vmem [shape: f32[32,1], index: 5, kind: input, shape index: {}]
  %s6 = inlined_call_operand.<no memory space> [shape: f32[1,1], index: 6, kind: input, shape index: {}]
  %s7 = inlined_call_operand.hbm [shape: f32[1,384], index: 7, kind: output, shape index: {}]
  %s8 = sld [smem:[#allocation0]]
  $region61: #{tpu_custom_call.1} parent=0
    _
  %s10 = ssub.s32 1, %s8
  %s11 = scalar_select 0, %s10, %s8
  %v12 = vstv %s6
  %13 = vst [vmem:[#allocation2] sm:$0x1] %v12
  $region1: #{tpu_custom_call.1} parent=0
    #allocation3 [shape = 'u8[1024]{0}', space=vmem, size = 0x400, scoped, tag = 'output window, operand 0']
    #allocation4 [shape = 's32[2]{0}', space=sflag, size = 0x8, scoped, tag = 'scoped memory for tpu_custom_call.1']
    %14 = vsyncpa [#allocation4], 0
    %s15 = scalar_lea.sflag [#allocation4], 1
    %16 = vsyncpa %s15, 0
    loop: start=0, step=1, limit=5
    $region2: #{tpu_custom_call.1} parent=1 // loop_pre_header
      _
    $region3: #{tpu_custom_call.1} parent=1 // loop_header
      %s18 = sphi 0, %s22
      %p19 = scmp.ge.s32.totalorder %s18, 5
      %s28 = sphi 0, %s30
      %s31 = sphi 0, %s28
      %s32 = sphi 0, %s31
      %s48 = sphi 0, %s32
      %s52 = sphi 0, %s52
      %s54 = sphi 0, %s52
      %s55 = sphi 0, %s54
      %s69 = sphi 0, %s55
      %s73 = sphi 0, %s73
      %s75 = sphi 0, %s73
      %s76 = sphi 0, %s75
      %s90 = sphi 0, %s76
      %s94 = sphi 0, %s94
      %s96 = sphi 0, %s94
      %s97 = sphi 0, %s96
      %s111 = sphi 0, %s97
      %s115 = sphi 0, %s115
      %s117 = sphi 0, %s115
      %s118 = sphi 0, %s117
      %s132 = sphi 0, %s118
      %s136 = sphi 0, %s136
      %s138 = sphi 0, %s136
      %s139 = sphi 0, %s138
      %s153 = sphi 0, %s139
      %s157 = sphi 0, %s157
      %s159 = sphi 0, %s157
      %s160 = sphi 0, %s159
      %s174 = sphi 0, %s160
      %s180 = sphi 0, %s182
      %s183 = sphi 0, %s180
      %s184 = sphi 0, %s183
      %s200 = sphi 0, %s184
    $region4: #{tpu_custom_call.1} parent=1 // loop_header_branch
      %21 = sbr.rel (%p19) target = $region8
    $region5: #{tpu_custom_call.1} parent=1 // loop_body
      %s23 = ssub.s32 %s18, 1
      %s24 = ssub.s32 %s18, 2
      %s25 = sadd.s32 %s18, 1
      %s26 = ssub.s32 %s18, %s25
      %p27 = scmp.eq.s32.totalorder %s26, 0
      %s29 = sadd.s32 %s28, 1
      %s30 = scalar_select %p27, %s28, %s29
      %p33 = pneg %p27
      %p34 = scmp.eq.s32.totalorder %s18, 2
      %p35 = por %p33, %p34
      %p36 = scmp.ne.s32.totalorder %s28, %s31
      %p37 = scmp.eq.s32.totalorder %s18, 0
      %p38 = por %p36, %p37
      %p39 = scmp.ne.s32.totalorder %s28, %s31
      %p40 = scmp.eq.s32.totalorder %s23, 2
      %p41 = por %p39, %p40
      %p42 = scmp.ne.s32.totalorder %s31, %s32
      %p43 = scmp.eq.s32.totalorder %s23, 0
      %p44 = por %p42, %p43
      %p45 = scmp.ne.s32.totalorder %s31, %s32
      %p46 = scmp.eq.s32.totalorder %s24, 2
      %p47 = por %p45, %p46
      %p49 = scmp.ne.s32.totalorder %s32, %s48
      %p50 = scmp.eq.s32.totalorder %s24, 0
      %p51 = por %p49, %p50
      %s53 = sadd.s32 %s52, 1
      %p56 = scmp.eq.s32.totalorder %s18, 2
      %p57 = scmp.ne.s32.totalorder %s52, %s54
      %p58 = scmp.eq.s32.totalorder %s18, 0
      %p59 = por %p57, %p58
      %p60 = scmp.ne.s32.totalorder %s52, %s54
      %p61 = scmp.eq.s32.totalorder %s23, 2
      %p62 = por %p60, %p61
      %p63 = scmp.ne.s32.totalorder %s54, %s55
      %p64 = scmp.eq.s32.totalorder %s23, 0
      %p65 = por %p63, %p64
      %p66 = scmp.ne.s32.totalorder %s54, %s55
      %p67 = scmp.eq.s32.totalorder %s24, 2
      %p68 = por %p66, %p67
      %p70 = scmp.ne.s32.totalorder %s55, %s69
      %p71 = scmp.eq.s32.totalorder %s24, 0
      %p72 = por %p70, %p71
      %s74 = sadd.s32 %s73, 1
      %p77 = scmp.eq.s32.totalorder %s18, 2
      %p78 = scmp.ne.s32.totalorder %s73, %s75
      %p79 = scmp.eq.s32.totalorder %s18, 0
      %p80 = por %p78, %p79
      %p81 = scmp.ne.s32.totalorder %s73, %s75
      %p82 = scmp.eq.s32.totalorder %s23, 2
      %p83 = por %p81, %p82
      %p84 = scmp.ne.s32.totalorder %s75, %s76
      %p85 = scmp.eq.s32.totalorder %s23, 0
      %p86 = por %p84, %p85
      %p87 = scmp.ne.s32.totalorder %s75, %s76
      %p88 = scmp.eq.s32.totalorder %s24, 2
      %p89 = por %p87, %p88
      %p91 = scmp.ne.s32.totalorder %s76, %s90
      %p92 = scmp.eq.s32.totalorder %s24, 0
      %p93 = por %p91, %p92
      %s95 = sadd.s32 %s94, 1
      %p98 = scmp.eq.s32.totalorder %s18, 2
      %p99 = scmp.ne.s32.totalorder %s94, %s96
      %p100 = scmp.eq.s32.totalorder %s18, 0
      %p101 = por %p99, %p100
      %p102 = scmp.ne.s32.totalorder %s94, %s96
      %p103 = scmp.eq.s32.totalorder %s23, 2
      %p104 = por %p102, %p103
      %p105 = scmp.ne.s32.totalorder %s96, %s97
      %p106 = scmp.eq.s32.totalorder %s23, 0
      %p107 = por %p105, %p106
      %p108 = scmp.ne.s32.totalorder %s96, %s97
      %p109 = scmp.eq.s32.totalorder %s24, 2
      %p110 = por %p108, %p109
      %p112 = scmp.ne.s32.totalorder %s97, %s111
      %p113 = scmp.eq.s32.totalorder %s24, 0
      %p114 = por %p112, %p113
      %s116 = sadd.s32 %s115, 1
      %p119 = scmp.eq.s32.totalorder %s18, 2
      %p120 = scmp.ne.s32.totalorder %s115, %s117
      %p121 = scmp.eq.s32.totalorder %s18, 0
      %p122 = por %p120, %p121
      %p123 = scmp.ne.s32.totalorder %s115, %s117
      %p124 = scmp.eq.s32.totalorder %s23, 2
      %p125 = por %p123, %p124
      %p126 = scmp.ne.s32.totalorder %s117, %s118
      %p127 = scmp.eq.s32.totalorder %s23, 0
      %p128 = por %p126, %p127
      %p129 = scmp.ne.s32.totalorder %s117, %s118
      %p130 = scmp.eq.s32.totalorder %s24, 2
      %p131 = por %p129, %p130
      %p133 = scmp.ne.s32.totalorder %s118, %s132
      %p134 = scmp.eq.s32.totalorder %s24, 0
      %p135 = por %p133, %p134
      %s137 = sadd.s32 %s136, 1
      %p140 = scmp.eq.s32.totalorder %s18, 2
      %p141 = scmp.ne.s32.totalorder %s136, %s138
      %p142 = scmp.eq.s32.totalorder %s18, 0
      %p143 = por %p141, %p142
      %p144 = scmp.ne.s32.totalorder %s136, %s138
      %p145 = scmp.eq.s32.totalorder %s23, 2
      %p146 = por %p144, %p145
      %p147 = scmp.ne.s32.totalorder %s138, %s139
      %p148 = scmp.eq.s32.totalorder %s23, 0
      %p149 = por %p147, %p148
      %p150 = scmp.ne.s32.totalorder %s138, %s139
      %p151 = scmp.eq.s32.totalorder %s24, 2
      %p152 = por %p150, %p151
      %p154 = scmp.ne.s32.totalorder %s139, %s153
      %p155 = scmp.eq.s32.totalorder %s24, 0
      %p156 = por %p154, %p155
      %s158 = sadd.s32 %s157, 1
      %p161 = scmp.eq.s32.totalorder %s18, 2
      %p162 = scmp.ne.s32.totalorder %s157, %s159
      %p163 = scmp.eq.s32.totalorder %s18, 0
      %p164 = por %p162, %p163
      %p165 = scmp.ne.s32.totalorder %s157, %s159
      %p166 = scmp.eq.s32.totalorder %s23, 2
      %p167 = por %p165, %p166
      %p168 = scmp.ne.s32.totalorder %s159, %s160
      %p169 = scmp.eq.s32.totalorder %s23, 0
      %p170 = por %p168, %p169
      %p171 = scmp.ne.s32.totalorder %s159, %s160
      %p172 = scmp.eq.s32.totalorder %s24, 2
      %p173 = por %p171, %p172
      %p175 = scmp.ne.s32.totalorder %s160, %s174
      %p176 = scmp.eq.s32.totalorder %s24, 0
      %p177 = por %p175, %p176
      %s178 = ssub.s32 %s18, %s25
      %p179 = scmp.eq.s32.totalorder %s178, 0
      %s181 = sadd.s32 %s180, 1
      %s182 = scalar_select %p179, %s180, %s181
      %p185 = pneg %p179
      %p186 = scmp.eq.s32.totalorder %s18, 2
      %p187 = por %p185, %p186
      %p188 = scmp.ne.s32.totalorder %s180, %s183
      %p189 = scmp.eq.s32.totalorder %s18, 0
      %p190 = por %p188, %p189
      %p191 = scmp.ne.s32.totalorder %s180, %s183
      %p192 = scmp.eq.s32.totalorder %s23, 2
      %p193 = por %p191, %p192
      %p194 = scmp.ne.s32.totalorder %s183, %s184
      %p195 = scmp.eq.s32.totalorder %s23, 0
      %p196 = por %p194, %p195
      %p197 = scmp.ne.s32.totalorder %s183, %s184
      %p198 = scmp.eq.s32.totalorder %s24, 2
      %p199 = por %p197, %p198
      %p201 = scmp.ne.s32.totalorder %s184, %s200
      %p202 = scmp.eq.s32.totalorder %s24, 0
      %p203 = por %p201, %p202
      %p204 = scmp.le.s32.totalorder 1, %s18
      %p205 = scmp.lt.s32.totalorder %s18, 4
      %p206 = pnand %p204, %p205
      %p207 = pneg %p206
      // Predicated region
      $region9: #{tpu_custom_call.1} parent=5 // pred_check
        _
      $region10: #{tpu_custom_call.1} parent=5 // pred_check_branch
        %209 = sbr.rel (%p206) target = $region12
      $region11: #{tpu_custom_call.1} parent=5 // pred_region
        %s210 = ssub.s32 %s18, 1
        // Predicated region
        $region13: #{tpu_custom_call.1} parent=11 // pred_check
          %p211 = pneg %p65
        $region14: #{tpu_custom_call.1} parent=11 // pred_check_branch
          %213 = sbr.rel (%p211) target = $region16
        $region15: #{tpu_custom_call.1} parent=11 // pred_region
          _
        $region16: #{tpu_custom_call.1} parent=11 // pred_fallthru
          _
        // Predicated region
        $region17: #{tpu_custom_call.1} parent=11 // pred_check
          %p214 = pneg %p86
        $region18: #{tpu_custom_call.1} parent=11 // pred_check_branch
          %216 = sbr.rel (%p214) target = $region20
        $region19: #{tpu_custom_call.1} parent=11 // pred_region
          _
        $region20: #{tpu_custom_call.1} parent=11 // pred_fallthru
          _
        // Predicated region
        $region21: #{tpu_custom_call.1} parent=11 // pred_check
          %p217 = pneg %p107
        $region22: #{tpu_custom_call.1} parent=11 // pred_check_branch
          %219 = sbr.rel (%p217) target = $region24
        $region23: #{tpu_custom_call.1} parent=11 // pred_region
          _
        $region24: #{tpu_custom_call.1} parent=11 // pred_fallthru
          _
        // Predicated region
        $region25: #{tpu_custom_call.1} parent=11 // pred_check
          %p220 = pneg %p128
        $region26: #{tpu_custom_call.1} parent=11 // pred_check_branch
          %222 = sbr.rel (%p220) target = $region28
        $region27: #{tpu_custom_call.1} parent=11 // pred_region
          _
        $region28: #{tpu_custom_call.1} parent=11 // pred_fallthru
          _
        // Predicated region
        $region29: #{tpu_custom_call.1} parent=11 // pred_check
          %p223 = pneg %p149
        $region30: #{tpu_custom_call.1} parent=11 // pred_check_branch
          %225 = sbr.rel (%p223) target = $region32
        $region31: #{tpu_custom_call.1} parent=11 // pred_region
          _
        $region32: #{tpu_custom_call.1} parent=11 // pred_fallthru
          _
        // Predicated region
        $region33: #{tpu_custom_call.1} parent=11 // pred_check
          %p226 = pneg %p170
        $region34: #{tpu_custom_call.1} parent=11 // pred_check_branch
          %228 = sbr.rel (%p226) target = $region36
        $region35: #{tpu_custom_call.1} parent=11 // pred_region
          _
        $region36: #{tpu_custom_call.1} parent=11 // pred_fallthru
          _
      $region12: #{tpu_custom_call.1} parent=5 // pred_fallthru
        _
      %p229 = scmp.lt.s32.totalorder %s18, 3
      // Predicated region
      $region37: #{tpu_custom_call.1} parent=5 // pred_check
        %p230 = pneg %p229
      $region38: #{tpu_custom_call.1} parent=5 // pred_check_branch
        %232 = sbr.rel (%p230) target = $region40
      $region39: #{tpu_custom_call.1} parent=5 // pred_region
        // Predicated region
        $region41: #{tpu_custom_call.1} parent=39 // pred_check
          %p233 = pneg %p38
        $region42: #{tpu_custom_call.1} parent=39 // pred_check_branch
          %235 = sbr.rel (%p233) target = $region44
        $region43: #{tpu_custom_call.1} parent=39 // pred_region
          %p236 = scmp.lt.s32.totalorder %s18, 2
          %s237 = scalar_select %p236, %s18, 2
          %s238 = smul.addr %s237, 8
          %s239 = scalar_lea.vmem %s0, %s238
        $region44: #{tpu_custom_call.1} parent=39 // pred_fallthru
          _
      $region40: #{tpu_custom_call.1} parent=5 // pred_fallthru
        _
      %p240 = scmp.le.s32.totalorder 1, %s18
      %p241 = scmp.lt.s32.totalorder %s18, 4
      %p242 = pnand %p240, %p241
      %p243 = pneg %p242
      // Predicated region
      $region45: #{tpu_custom_call.1} parent=5 // pred_check
        _
      $region46: #{tpu_custom_call.1} parent=5 // pred_check_branch
        %245 = sbr.rel (%p242) target = $region48
      $region47: #{tpu_custom_call.1} parent=5 // pred_region
        %s246 = ssub.s32 %s18, 1
        %p247 = scmp.lt.s32.totalorder %s23, 2
        %s248 = scalar_select %p247, %s23, 2
        %s249 = smul.addr %s248, 8
        %s250 = scalar_lea.vmem %s0, %s249
        %p251 = pneg %p44
        %p252 = pneg %p41
        %p253 = pneg %p65
        %p254 = pneg %p62
        %p255 = pneg %p86
        %p256 = pneg %p83
        %p257 = pneg %p107
        %p258 = pneg %p104
        %p259 = pneg %p128
        %p260 = pneg %p125
        %p261 = pneg %p149
        %p262 = pneg %p146
        %p263 = pneg %p170
        %p264 = pneg %p167
        %p265 = pneg %p196
        %p266 = pneg %p193
        %s267 = sand.u32 %s183, 1
        %s268 = scalar_lea.sflag [#allocation4], %s267
        %s269 = sand.u32 %s183, 1
        %s270 = scalar_lea.vmem [#allocation3], %s269
        %p271 = scmp.lt.s32.totalorder %s23, 2
        %s272 = scalar_select %p271, %s23, 2
        %s273 = smul.addr %s272, 8
        %s274 = scalar_lea.vmem %s0, %s273
        %v275 = vld [vmem:[%s1] sm:$0xff]
        %v276 = vld [vmem:[%s1 + $0x8] sm:$0xff]
        %v277 = vld [vmem:[%s1 + $0x10] sm:$0xff]
        %v278 = vld [vmem:[%s1 + $0x18] sm:$0xff]
        %v279 = vld [vmem:[%s274] sm:$0xff]
        %v280 = vld [vmem:[%s2] sm:$0xff]
        %v281 = vld [vmem:[%s2 + $0x8] sm:$0xff]
        %v282 = vld [vmem:[%s2 + $0x10] sm:$0xff]
        %v283 = vld [vmem:[%s2 + $0x18] sm:$0xff]
        %285 = vset.pattern.permute.xlu0 0
        %286 = vperm.xlu0 %285, %v280
        %v287 = vpop.permute.xlu0 %286
        %290 = vset.pattern.permute.xlu0 0
        %291 = vperm.xlu0 %290, %v281
        %v292 = vpop.permute.xlu0 %291
        %295 = vset.pattern.permute.xlu0 0
        %296 = vperm.xlu0 %295, %v282
        %v297 = vpop.permute.xlu0 %296
        %300 = vset.pattern.permute.xlu0 0
        %301 = vperm.xlu0 %300, %v283
        %v302 = vpop.permute.xlu0 %301
        %vm304 = vcmask 64512
        %v306 = vsel %vm304, %v275, 0
        %v309 = vsel %vm304, %v276, 0
        %v312 = vsel %vm304, %v277, 0
        %v315 = vsel %vm304, %v278, 0
        %317 = vmatprep.subr.mxu0 0.0
        %318 = vmatpush1.msra.mxu0 %v279
        %319 = vmatprep.subr.mxu0 0.0
        %320 = vmatpush1.msra.mxu0 0.0
        %321 = vmatprep.subr.mxu0 0.0
        %322 = vmatpush1.msra.mxu0 0.0
        %323 = vmatprep.subr.mxu0 0.0
        %324 = vmatpush1.msra.mxu0 0.0
        %325 = vmatprep.subr.mxu0 0.0
        %326 = vmatpush1.msra.mxu0 0.0
        %327 = vmatprep.subr.mxu0 0.0
        %328 = vmatpush1.msra.mxu0 0.0
        %329 = vmatprep.subr.mxu0 0.0
        %330 = vmatpush1.msra.mxu0 0.0
        %331 = vmatprep.subr.mxu0 0.0
        %332 = vmatpush1.msra.mxu0 0.0
        %333 = vmatprep.subr.mxu0 0.0
        %334 = vmatpush1.msra.mxu0 0.0
        %335 = vmatprep.subr.mxu0 0.0
        %336 = vmatpush1.msra.mxu0 0.0
        %337 = vmatprep.subr.mxu0 0.0
        %338 = vmatpush1.msra.mxu0 0.0
        %339 = vmatprep.subr.mxu0 0.0
        %340 = vmatpush1.msra.mxu0 0.0
        %341 = vmatprep.subr.mxu0 0.0
        %342 = vmatpush1.msra.mxu0 0.0
        %343 = vmatprep.subr.mxu0 0.0
        %344 = vmatpush1.msra.mxu0 0.0
        %345 = vmatprep.subr.mxu0 0.0
        %346 = vmatpush1.msra.mxu0 0.0
        %347 = vmatprep.subr.mxu0 0.0
        %348 = vmatpush1.msra.mxu0 0.0
        %349 = vmatprep.subr.mxu0 0.0
        %350 = vmatpush1.msra.mxu0 0.0
        %351 = vmatprep.subr.mxu0 0.0
        %352 = vmatpush1.msra.mxu0 0.0
        %353 = vmatprep.subr.mxu0 0.0
        %354 = vmatpush1.msra.mxu0 0.0
        %355 = vmatprep.subr.mxu0 0.0
        %356 = vmatpush1.msra.mxu0 0.0
        %357 = vmatprep.subr.mxu0 0.0
        %358 = vmatpush1.msra.mxu0 0.0
        %359 = vmatprep.subr.mxu0 0.0
        %360 = vmatpush1.msra.mxu0 0.0
        %361 = vmatprep.subr.mxu0 0.0
        %362 = vmatpush1.msra.mxu0 0.0
        %363 = vmatprep.subr.mxu0 0.0
        %364 = vmatpush1.msra.mxu0 0.0
        %365 = vmatprep.subr.mxu0 0.0
        %366 = vmatpush1.msra.mxu0 0.0
        %367 = vmatprep.subr.mxu0 0.0
        %368 = vmatpush1.msra.mxu0 0.0
        %369 = vmatprep.subr.mxu0 0.0
        %370 = vmatpush1.msra.mxu0 0.0
        %371 = vmatprep.subr.mxu0 0.0
        %372 = vmatpush1.msra.mxu0 0.0
        %373 = vmatprep.subr.mxu0 0.0
        %374 = vmatpush1.msra.mxu0 0.0
        %375 = vmatprep.subr.mxu0 0.0
        %376 = vmatpush1.msra.mxu0 0.0
        %377 = vmatprep.subr.mxu0 0.0
        %378 = vmatpush1.msra.mxu0 0.0
        %379 = vmatprep.subr.mxu0 0.0
        %380 = vmatpush1.msra.mxu0 0.0
        %381 = vmatprep.mubr.f32.mxu0 0.0
        %382 = vmatmul.mubr.f32.gmra.mrb[0].mxu0 %v306
        %v383 = vpop.f32.mrb[0].mxu0
        %v384 = vadd.f32 %v287, %v383
        %v385 = vpop.f32.mrb[0].mxu0
        %386 = vmatprep.mubr.f32.mxu0 0.0
        %387 = vmatmul.mubr.f32.gmra.mrb[0].mxu0 %v309
        %v388 = vpop.f32.mrb[0].mxu0
        %v389 = vadd.f32 %v292, %v388
        %v390 = vpop.f32.mrb[0].mxu0
        %391 = vmatprep.mubr.f32.mxu0 0.0
        %392 = vmatmul.mubr.f32.gmra.mrb[0].mxu0 %v312
        %v393 = vpop.f32.mrb[0].mxu0
        %v394 = vadd.f32 %v297, %v393
        %v395 = vpop.f32.mrb[0].mxu0
        %396 = vmatprep.mubr.f32.mxu0 0.0
        %397 = vmatmul.mubr.f32.gmra.mrb[0].mxu0 %v315
        %v398 = vpop.f32.mrb[0].mxu0
        %v399 = vadd.f32 %v302, %v398
        %v400 = vpop.f32.mrb[0].mxu0
        %401 = vdwg.mxu0
        %v402 = vand.u32 2147483647, %v384
        %vm403 = vcmp.le.f32.partialorder %v402, 0.7853982
        %vm404 = vcmp.lt.s32.totalorder %v384, 0
        %v405 = vand.u32 %v384, 2139095040
        %v406 = vshrl.u32 %v405, 23
        %v407 = vsub.s32 %v406, 127
        %v408 = vand.u32 2147483647, %v384
        %v409 = vand.u32 %v408, 8388607
        %v410 = vor.u32 %v409, 8388608
        %v411 = vsub.s32 0, %v410
        %v412 = vadd.s32 %v407, 1
        %vm413 = vcmp.gt.s32.totalorder %v412, 0
        %v414 = vsel %vm413, %v412, 0
        %v415 = vshrl.u32 %v414, 5
        %v416 = vand.u32 %v414, 31
        %v417 = vsub.s32 32, %v416
        %v418 = vshrl.u32 683565275, %v417
        %v419 = vshll.u32 683565275, %v416
        %v420 = vshrl.u32 2475754826, %v417
        %v421 = vor.u32 %v419, %v420
        %v422 = vshll.u32 2475754826, %v416
        %v423 = vshrl.u32 2131351028, %v417
        %v424 = vor.u32 %v422, %v423
        %v425 = vshll.u32 2131351028, %v416
        %v426 = vshrl.u32 2102212464, %v417
        %v427 = vor.u32 %v425, %v426
        %v428 = vshll.u32 2102212464, %v416
        %v429 = vshrl.u32 920167782, %v417
        %v430 = vor.u32 %v428, %v429
        %v431 = vshll.u32 920167782, %v416
        %v432 = vshrl.u32 1326507024, %v417
        %v433 = vor.u32 %v431, %v432
        %vm434 = vcmp.lt.s32.totalorder %v415, 1
        %vm435 = vcmp.lt.s32.totalorder %v415, 2
        %vm436 = vcmp.lt.s32.totalorder %v415, 3
        %vm437 = vcmp.lt.s32.totalorder %v415, 4
        %v438 = vsel %vm434, %v418, %v421
        %v439 = vsel %vm437, %v427, 2102212464
        %v440 = vsel %vm436, %v424, %v439
        %v441 = vsel %vm435, %v438, %v440
        %v442 = vsel %vm434, %v421, %v424
        %v443 = vsel %vm437, %v430, 920167782
        %v444 = vsel %vm436, %v427, %v443
        %v445 = vsel %vm435, %v442, %v444
        %v446 = vsel %vm434, %v424, %v427
        %v447 = vsel %vm437, %v433, 1326507024
        %v448 = vsel %vm436, %v430, %v447
        %v449 = vsel %vm435, %v446, %v448
        %v450 = vshll.u32 %v410, 8
        %v451 = vmul.u32.u64.compose %v450, %v449
        %v452 = vextract.low.u32 %v451
        %v453 = vextract.high.u32 %v451
        %v454 = vmul.u32.u64.compose %v450, %v445
        %v455 = vextract.low.u32 %v454
        %v456 = vextract.high.u32 %v454
        %v457 = vmul.u32 %v450, %v441
        %v458 = vadd.s32 %v453, %v455
        %vm459 = vc.u32 %v453, %v455
        %v460 = vadd.s32 %v456, 1
        %v461 = vsel %vm459, %v460, %v456
        %v462 = vadd.s32 %v457, %v461
        %v463 = vadd.s32 %v462, 536870912
        %v464 = vshrl.u32 %v463, 30
        %v465 = vshll.u32 %v464, 30
        %v466 = vsub.s32 %v462, %v465
        %vm467 = vcmp.lt.s32.totalorder %v466, 0
        %v468 = vsub.s32 0, %v466
        %v469 = vsel %vm467, %v468, %v466
        %v470 = vclz %v469
        %v471 = vsub.s32 %v470, 2
        %vm472 = vcmp.gt.s32.totalorder 0, %v471
        %v473 = vsel %vm472, 0, %v471
        %v474 = vsub.s32 32, %v473
        %v475 = vshll.u32 %v466, %v473
        %v476 = vshrl.u32 %v458, %v474
        %v477 = vor.u32 %v475, %v476
        %v478 = vsub.s32 4294967266, %v473
        %v479 = vadd.s32 %v478, 127
        %v480 = vshll.u32 %v479, 23
        %v481 = vor.u32 4788187, %v480
        %v482 = vand.u32 2147483647, %v481
        %v484 = vcvt.s32.f32 %v477
        %v485 = vmul.f32 %v484, %v482
        %v486 = vxor.u32 %v485, 2147483648
        %v487 = vsel %vm404, %v486, %v485
        %v488 = vsub.s32 4, %v464
        %v489 = vsel %vm404, %v488, %v464
        %v490 = vsel %vm403, %v384, %v487
        %v491 = vsel %vm403, 0, %v489
        %v492 = vcosq.f32.pop %v490
        %v493 = vsinq.f32.pop %v490
        %vm494 = vweird.f32 %v384
        %v495 = vand.u32 %v491, 3
        %vm496 = vcmp.lt.s32.totalorder %v495, 2
        %vm497 = vcmp.eq.s32.totalorder %v495, 0
        %v498 = vxor.u32 %v493, 2147483648
        %v499 = vsel %vm497, %v492, %v498
        %vm500 = vcmp.eq.s32.totalorder %v495, 2
        %v501 = vxor.u32 %v492, 2147483648
        %v502 = vsel %vm500, %v501, %v493
        %v503 = vsel %vm496, %v499, %v502
        %v504 = vsel %vm494, nan, %v503
        %v505 = vand.u32 2147483647, %v389
        %vm506 = vcmp.le.f32.partialorder %v505, 0.7853982
        %vm507 = vcmp.lt.s32.totalorder %v389, 0
        %v508 = vand.u32 %v389, 2139095040
        %v509 = vshrl.u32 %v508, 23
        %v510 = vsub.s32 %v509, 127
        %v511 = vand.u32 2147483647, %v389
        %v512 = vand.u32 %v511, 8388607
        %v513 = vor.u32 %v512, 8388608
        %v514 = vsub.s32 0, %v513
        %v515 = vadd.s32 %v510, 1
        %vm516 = vcmp.gt.s32.totalorder %v515, 0
        %v517 = vsel %vm516, %v515, 0
        %v518 = vshrl.u32 %v517, 5
        %v519 = vand.u32 %v517, 31
        %v520 = vsub.s32 32, %v519
        %v521 = vshrl.u32 683565275, %v520
        %v522 = vshll.u32 683565275, %v519
        %v523 = vshrl.u32 2475754826, %v520
        %v524 = vor.u32 %v522, %v523
        %v525 = vshll.u32 2475754826, %v519
        %v526 = vshrl.u32 2131351028, %v520
        %v527 = vor.u32 %v525, %v526
        %v528 = vshll.u32 2131351028, %v519
        %v529 = vshrl.u32 2102212464, %v520
        %v530 = vor.u32 %v528, %v529
        %v531 = vshll.u32 2102212464, %v519
        %v532 = vshrl.u32 920167782, %v520
        %v533 = vor.u32 %v531, %v532
        %v534 = vshll.u32 920167782, %v519
        %v535 = vshrl.u32 1326507024, %v520
        %v536 = vor.u32 %v534, %v535
        %vm537 = vcmp.lt.s32.totalorder %v518, 1
        %vm538 = vcmp.lt.s32.totalorder %v518, 2
        %vm539 = vcmp.lt.s32.totalorder %v518, 3
        %vm540 = vcmp.lt.s32.totalorder %v518, 4
        %v541 = vsel %vm537, %v521, %v524
        %v542 = vsel %vm540, %v530, 2102212464
        %v543 = vsel %vm539, %v527, %v542
        %v544 = vsel %vm538, %v541, %v543
        %v545 = vsel %vm537, %v524, %v527
        %v546 = vsel %vm540, %v533, 920167782
        %v547 = vsel %vm539, %v530, %v546
        %v548 = vsel %vm538, %v545, %v547
        %v549 = vsel %vm537, %v527, %v530
        %v550 = vsel %vm540, %v536, 1326507024
        %v551 = vsel %vm539, %v533, %v550
        %v552 = vsel %vm538, %v549, %v551
        %v553 = vshll.u32 %v513, 8
        %v554 = vmul.u32.u64.compose %v553, %v552
        %v555 = vextract.low.u32 %v554
        %v556 = vextract.high.u32 %v554
        %v557 = vmul.u32.u64.compose %v553, %v548
        %v558 = vextract.low.u32 %v557
        %v559 = vextract.high.u32 %v557
        %v560 = vmul.u32 %v553, %v544
        %v561 = vadd.s32 %v556, %v558
        %vm562 = vc.u32 %v556, %v558
        %v563 = vadd.s32 %v559, 1
        %v564 = vsel %vm562, %v563, %v559
        %v565 = vadd.s32 %v560, %v564
        %v566 = vadd.s32 %v565, 536870912
        %v567 = vshrl.u32 %v566, 30
        %v568 = vshll.u32 %v567, 30
        %v569 = vsub.s32 %v565, %v568
        %vm570 = vcmp.lt.s32.totalorder %v569, 0
        %v571 = vsub.s32 0, %v569
        %v572 = vsel %vm570, %v571, %v569
        %v573 = vclz %v572
        %v574 = vsub.s32 %v573, 2
        %vm575 = vcmp.gt.s32.totalorder 0, %v574
        %v576 = vsel %vm575, 0, %v574
        %v577 = vsub.s32 32, %v576
        %v578 = vshll.u32 %v569, %v576
        %v579 = vshrl.u32 %v561, %v577
        %v580 = vor.u32 %v578, %v579
        %v581 = vsub.s32 4294967266, %v576
        %v582 = vadd.s32 %v581, 127
        %v583 = vshll.u32 %v582, 23
        %v584 = vor.u32 4788187, %v583
        %v585 = vand.u32 2147483647, %v584
        %v587 = vcvt.s32.f32 %v580
        %v588 = vmul.f32 %v587, %v585
        %v589 = vxor.u32 %v588, 2147483648
        %v590 = vsel %vm507, %v589, %v588
        %v591 = vsub.s32 4, %v567
        %v592 = vsel %vm507, %v591, %v567
        %v593 = vsel %vm506, %v389, %v590
        %v594 = vsel %vm506, 0, %v592
        %v595 = vcosq.f32.pop %v593
        %v596 = vsinq.f32.pop %v593
        %vm597 = vweird.f32 %v389
        %v598 = vand.u32 %v594, 3
        %vm599 = vcmp.lt.s32.totalorder %v598, 2
        %vm600 = vcmp.eq.s32.totalorder %v598, 0
        %v601 = vxor.u32 %v596, 2147483648
        %v602 = vsel %vm600, %v595, %v601
        %vm603 = vcmp.eq.s32.totalorder %v598, 2
        %v604 = vxor.u32 %v595, 2147483648
        %v605 = vsel %vm603, %v604, %v596
        %v606 = vsel %vm599, %v602, %v605
        %v607 = vsel %vm597, nan, %v606
        %v608 = vand.u32 2147483647, %v394
        %vm609 = vcmp.le.f32.partialorder %v608, 0.7853982
        %vm610 = vcmp.lt.s32.totalorder %v394, 0
        %v611 = vand.u32 %v394, 2139095040
        %v612 = vshrl.u32 %v611, 23
        %v613 = vsub.s32 %v612, 127
        %v614 = vand.u32 2147483647, %v394
        %v615 = vand.u32 %v614, 8388607
        %v616 = vor.u32 %v615, 8388608
        %v617 = vsub.s32 0, %v616
        %v618 = vadd.s32 %v613, 1
        %vm619 = vcmp.gt.s32.totalorder %v618, 0
        %v620 = vsel %vm619, %v618, 0
        %v621 = vshrl.u32 %v620, 5
        %v622 = vand.u32 %v620, 31
        %v623 = vsub.s32 32, %v622
        %v624 = vshrl.u32 683565275, %v623
        %v625 = vshll.u32 683565275, %v622
        %v626 = vshrl.u32 2475754826, %v623
        %v627 = vor.u32 %v625, %v626
        %v628 = vshll.u32 2475754826, %v622
        %v629 = vshrl.u32 2131351028, %v623
        %v630 = vor.u32 %v628, %v629
        %v631 = vshll.u32 2131351028, %v622
        %v632 = vshrl.u32 2102212464, %v623
        %v633 = vor.u32 %v631, %v632
        %v634 = vshll.u32 2102212464, %v622
        %v635 = vshrl.u32 920167782, %v623
        %v636 = vor.u32 %v634, %v635
        %v637 = vshll.u32 920167782, %v622
        %v638 = vshrl.u32 1326507024, %v623
        %v639 = vor.u32 %v637, %v638
        %vm640 = vcmp.lt.s32.totalorder %v621, 1
        %vm641 = vcmp.lt.s32.totalorder %v621, 2
        %vm642 = vcmp.lt.s32.totalorder %v621, 3
        %vm643 = vcmp.lt.s32.totalorder %v621, 4
        %v644 = vsel %vm640, %v624, %v627
        %v645 = vsel %vm643, %v633, 2102212464
        %v646 = vsel %vm642, %v630, %v645
        %v647 = vsel %vm641, %v644, %v646
        %v648 = vsel %vm640, %v627, %v630
        %v649 = vsel %vm643, %v636, 920167782
        %v650 = vsel %vm642, %v633, %v649
        %v651 = vsel %vm641, %v648, %v650
        %v652 = vsel %vm640, %v630, %v633
        %v653 = vsel %vm643, %v639, 1326507024
        %v654 = vsel %vm642, %v636, %v653
        %v655 = vsel %vm641, %v652, %v654
        %v656 = vshll.u32 %v616, 8
        %v657 = vmul.u32.u64.compose %v656, %v655
        %v658 = vextract.low.u32 %v657
        %v659 = vextract.high.u32 %v657
        %v660 = vmul.u32.u64.compose %v656, %v651
        %v661 = vextract.low.u32 %v660
        %v662 = vextract.high.u32 %v660
        %v663 = vmul.u32 %v656, %v647
        %v664 = vadd.s32 %v659, %v661
        %vm665 = vc.u32 %v659, %v661
        %v666 = vadd.s32 %v662, 1
        %v667 = vsel %vm665, %v666, %v662
        %v668 = vadd.s32 %v663, %v667
        %v669 = vadd.s32 %v668, 536870912
        %v670 = vshrl.u32 %v669, 30
        %v671 = vshll.u32 %v670, 30
        %v672 = vsub.s32 %v668, %v671
        %vm673 = vcmp.lt.s32.totalorder %v672, 0
        %v674 = vsub.s32 0, %v672
        %v675 = vsel %vm673, %v674, %v672
        %v676 = vclz %v675
        %v677 = vsub.s32 %v676, 2
        %vm678 = vcmp.gt.s32.totalorder 0, %v677
        %v679 = vsel %vm678, 0, %v677
        %v680 = vsub.s32 32, %v679
        %v681 = vshll.u32 %v672, %v679
        %v682 = vshrl.u32 %v664, %v680
        %v683 = vor.u32 %v681, %v682
        %v684 = vsub.s32 4294967266, %v679
        %v685 = vadd.s32 %v684, 127
        %v686 = vshll.u32 %v685, 23
        %v687 = vor.u32 4788187, %v686
        %v688 = vand.u32 2147483647, %v687
        %v690 = vcvt.s32.f32 %v683
        %v691 = vmul.f32 %v690, %v688
        %v692 = vxor.u32 %v691, 2147483648
        %v693 = vsel %vm610, %v692, %v691
        %v694 = vsub.s32 4, %v670
        %v695 = vsel %vm610, %v694, %v670
        %v696 = vsel %vm609, %v394, %v693
        %v697 = vsel %vm609, 0, %v695
        %v698 = vcosq.f32.pop %v696
        %v699 = vsinq.f32.pop %v696
        %vm700 = vweird.f32 %v394
        %v701 = vand.u32 %v697, 3
        %vm702 = vcmp.lt.s32.totalorder %v701, 2
        %vm703 = vcmp.eq.s32.totalorder %v701, 0
        %v704 = vxor.u32 %v699, 2147483648
        %v705 = vsel %vm703, %v698, %v704
        %vm706 = vcmp.eq.s32.totalorder %v701, 2
        %v707 = vxor.u32 %v698, 2147483648
        %v708 = vsel %vm706, %v707, %v699
        %v709 = vsel %vm702, %v705, %v708
        %v710 = vsel %vm700, nan, %v709
        %v711 = vand.u32 2147483647, %v399
        %vm712 = vcmp.le.f32.partialorder %v711, 0.7853982
        %vm713 = vcmp.lt.s32.totalorder %v399, 0
        %v714 = vand.u32 %v399, 2139095040
        %v715 = vshrl.u32 %v714, 23
        %v716 = vsub.s32 %v715, 127
        %v717 = vand.u32 2147483647, %v399
        %v718 = vand.u32 %v717, 8388607
        %v719 = vor.u32 %v718, 8388608
        %v720 = vsub.s32 0, %v719
        %v721 = vadd.s32 %v716, 1
        %vm722 = vcmp.gt.s32.totalorder %v721, 0
        %v723 = vsel %vm722, %v721, 0
        %v724 = vshrl.u32 %v723, 5
        %v725 = vand.u32 %v723, 31
        %v726 = vsub.s32 32, %v725
        %v727 = vshrl.u32 683565275, %v726
        %v728 = vshll.u32 683565275, %v725
        %v729 = vshrl.u32 2475754826, %v726
        %v730 = vor.u32 %v728, %v729
        %v731 = vshll.u32 2475754826, %v725
        %v732 = vshrl.u32 2131351028, %v726
        %v733 = vor.u32 %v731, %v732
        %v734 = vshll.u32 2131351028, %v725
        %v735 = vshrl.u32 2102212464, %v726
        %v736 = vor.u32 %v734, %v735
        %v737 = vshll.u32 2102212464, %v725
        %v738 = vshrl.u32 920167782, %v726
        %v739 = vor.u32 %v737, %v738
        %v740 = vshll.u32 920167782, %v725
        %v741 = vshrl.u32 1326507024, %v726
        %v742 = vor.u32 %v740, %v741
        %vm743 = vcmp.lt.s32.totalorder %v724, 1
        %vm744 = vcmp.lt.s32.totalorder %v724, 2
        %vm745 = vcmp.lt.s32.totalorder %v724, 3
        %vm746 = vcmp.lt.s32.totalorder %v724, 4
        %v747 = vsel %vm743, %v727, %v730
        %v748 = vsel %vm746, %v736, 2102212464
        %v749 = vsel %vm745, %v733, %v748
        %v750 = vsel %vm744, %v747, %v749
        %v751 = vsel %vm743, %v730, %v733
        %v752 = vsel %vm746, %v739, 920167782
        %v753 = vsel %vm745, %v736, %v752
        %v754 = vsel %vm744, %v751, %v753
        %v755 = vsel %vm743, %v733, %v736
        %v756 = vsel %vm746, %v742, 1326507024
        %v757 = vsel %vm745, %v739, %v756
        %v758 = vsel %vm744, %v755, %v757
        %v759 = vshll.u32 %v719, 8
        %v760 = vmul.u32.u64.compose %v759, %v758
        %v761 = vextract.low.u32 %v760
        %v762 = vextract.high.u32 %v760
        %v763 = vmul.u32.u64.compose %v759, %v754
        %v764 = vextract.low.u32 %v763
        %v765 = vextract.high.u32 %v763
        %v766 = vmul.u32 %v759, %v750
        %v767 = vadd.s32 %v762, %v764
        %vm768 = vc.u32 %v762, %v764
        %v769 = vadd.s32 %v765, 1
        %v770 = vsel %vm768, %v769, %v765
        %v771 = vadd.s32 %v766, %v770
        %v772 = vadd.s32 %v771, 536870912
        %v773 = vshrl.u32 %v772, 30
        %v774 = vshll.u32 %v773, 30
        %v775 = vsub.s32 %v771, %v774
        %vm776 = vcmp.lt.s32.totalorder %v775, 0
        %v777 = vsub.s32 0, %v775
        %v778 = vsel %vm776, %v777, %v775
        %v779 = vclz %v778
        %v780 = vsub.s32 %v779, 2
        %vm781 = vcmp.gt.s32.totalorder 0, %v780
        %v782 = vsel %vm781, 0, %v780
        %v783 = vsub.s32 32, %v782
        %v784 = vshll.u32 %v775, %v782
        %v785 = vshrl.u32 %v767, %v783
        %v786 = vor.u32 %v784, %v785
        %v787 = vsub.s32 4294967266, %v782
        %v788 = vadd.s32 %v787, 127
        %v789 = vshll.u32 %v788, 23
        %v790 = vor.u32 4788187, %v789
        %v791 = vand.u32 2147483647, %v790
        %v793 = vcvt.s32.f32 %v786
        %v794 = vmul.f32 %v793, %v791
        %v795 = vxor.u32 %v794, 2147483648
        %v796 = vsel %vm713, %v795, %v794
        %v797 = vsub.s32 4, %v773
        %v798 = vsel %vm713, %v797, %v773
        %v799 = vsel %vm712, %v399, %v796
        %v800 = vsel %vm712, 0, %v798
        %v801 = vcosq.f32.pop %v799
        %v802 = vsinq.f32.pop %v799
        %vm803 = vweird.f32 %v399
        %v804 = vand.u32 %v800, 3
        %vm805 = vcmp.lt.s32.totalorder %v804, 2
        %vm806 = vcmp.eq.s32.totalorder %v804, 0
        %v807 = vxor.u32 %v802, 2147483648
        %v808 = vsel %vm806, %v801, %v807
        %vm809 = vcmp.eq.s32.totalorder %v804, 2
        %v810 = vxor.u32 %v801, 2147483648
        %v811 = vsel %vm809, %v810, %v802
        %v812 = vsel %vm805, %v808, %v811
        %v813 = vsel %vm803, nan, %v812
        %v814 = vld [vmem:[%s3] sm:$0xff]
        %v815 = vld [vmem:[%s3 + $0x8] sm:$0xff]
        %v816 = vld [vmem:[%s3 + $0x10] sm:$0xff]
        %v817 = vld [vmem:[%s3 + $0x18] sm:$0xff]
        %v818 = vld [vmem:[%s4] sm:$0xff]
        %v819 = vld [vmem:[%s4 + $0x8] sm:$0xff]
        %v820 = vld [vmem:[%s4 + $0x10] sm:$0xff]
        %v821 = vld [vmem:[%s4 + $0x18] sm:$0xff]
        %823 = vset.pattern.permute.xlu0 0
        %824 = vperm.xlu0 %823, %v818
        %v825 = vpop.permute.xlu0 %824
        %828 = vset.pattern.permute.xlu0 0
        %829 = vperm.xlu0 %828, %v819
        %v830 = vpop.permute.xlu0 %829
        %833 = vset.pattern.permute.xlu0 0
        %834 = vperm.xlu0 %833, %v820
        %v835 = vpop.permute.xlu0 %834
        %838 = vset.pattern.permute.xlu0 0
        %839 = vperm.xlu0 %838, %v821
        %v840 = vpop.permute.xlu0 %839
        %vm842 = vcmask 261120
        %v844 = vsel %vm842, %v814, 0
        %v847 = vsel %vm842, %v815, 0
        %v850 = vsel %vm842, %v816, 0
        %v853 = vsel %vm842, %v817, 0
        %855 = vmatprep.subr.mxu0 0.0
        %856 = vmatpush1.msra.mxu0 %v504
        %857 = vmatprep.subr.mxu0 0.0
        %858 = vmatpush1.msra.mxu0 %v607
        %859 = vmatprep.subr.mxu0 0.0
        %860 = vmatpush1.msra.mxu0 %v710
        %861 = vmatprep.subr.mxu0 0.0
        %862 = vmatpush1.msra.mxu0 %v813
        %863 = vmatprep.subr.mxu0 0.0
        %864 = vmatpush1.msra.mxu0 0.0
        %865 = vmatprep.subr.mxu0 0.0
        %866 = vmatpush1.msra.mxu0 0.0
        %867 = vmatprep.subr.mxu0 0.0
        %868 = vmatpush1.msra.mxu0 0.0
        %869 = vmatprep.subr.mxu0 0.0
        %870 = vmatpush1.msra.mxu0 0.0
        %871 = vmatprep.subr.mxu0 0.0
        %872 = vmatpush1.msra.mxu0 0.0
        %873 = vmatprep.subr.mxu0 0.0
        %874 = vmatpush1.msra.mxu0 0.0
        %875 = vmatprep.subr.mxu0 0.0
        %876 = vmatpush1.msra.mxu0 0.0
        %877 = vmatprep.subr.mxu0 0.0
        %878 = vmatpush1.msra.mxu0 0.0
        %879 = vmatprep.subr.mxu0 0.0
        %880 = vmatpush1.msra.mxu0 0.0
        %881 = vmatprep.subr.mxu0 0.0
        %882 = vmatpush1.msra.mxu0 0.0
        %883 = vmatprep.subr.mxu0 0.0
        %884 = vmatpush1.msra.mxu0 0.0
        %885 = vmatprep.subr.mxu0 0.0
        %886 = vmatpush1.msra.mxu0 0.0
        %887 = vmatprep.subr.mxu0 0.0
        %888 = vmatpush1.msra.mxu0 0.0
        %889 = vmatprep.subr.mxu0 0.0
        %890 = vmatpush1.msra.mxu0 0.0
        %891 = vmatprep.subr.mxu0 0.0
        %892 = vmatpush1.msra.mxu0 0.0
        %893 = vmatprep.subr.mxu0 0.0
        %894 = vmatpush1.msra.mxu0 0.0
        %895 = vmatprep.subr.mxu0 0.0
        %896 = vmatpush1.msra.mxu0 0.0
        %897 = vmatprep.subr.mxu0 0.0
        %898 = vmatpush1.msra.mxu0 0.0
        %899 = vmatprep.subr.mxu0 0.0
        %900 = vmatpush1.msra.mxu0 0.0
        %901 = vmatprep.subr.mxu0 0.0
        %902 = vmatpush1.msra.mxu0 0.0
        %903 = vmatprep.subr.mxu0 0.0
        %904 = vmatpush1.msra.mxu0 0.0
        %905 = vmatprep.subr.mxu0 0.0
        %906 = vmatpush1.msra.mxu0 0.0
        %907 = vmatprep.subr.mxu0 0.0
        %908 = vmatpush1.msra.mxu0 0.0
        %909 = vmatprep.subr.mxu0 0.0
        %910 = vmatpush1.msra.mxu0 0.0
        %911 = vmatprep.subr.mxu0 0.0
        %912 = vmatpush1.msra.mxu0 0.0
        %913 = vmatprep.subr.mxu0 0.0
        %914 = vmatpush1.msra.mxu0 0.0
        %915 = vmatprep.subr.mxu0 0.0
        %916 = vmatpush1.msra.mxu0 0.0
        %917 = vmatprep.subr.mxu0 0.0
        %918 = vmatpush1.msra.mxu0 0.0
        %919 = vmatprep.mubr.f32.mxu0 0.0
        %920 = vmatmul.mubr.f32.gmra.mrb[0].mxu0 %v844
        %v921 = vpop.f32.mrb[0].mxu0
        %v922 = vadd.f32 %v825, %v921
        %v923 = vpop.f32.mrb[0].mxu0
        %924 = vmatprep.mubr.f32.mxu0 0.0
        %925 = vmatmul.mubr.f32.gmra.mrb[0].mxu0 %v847
        %v926 = vpop.f32.mrb[0].mxu0
        %v927 = vadd.f32 %v830, %v926
        %v928 = vpop.f32.mrb[0].mxu0
        %929 = vmatprep.mubr.f32.mxu0 0.0
        %930 = vmatmul.mubr.f32.gmra.mrb[0].mxu0 %v850
        %v931 = vpop.f32.mrb[0].mxu0
        %v932 = vadd.f32 %v835, %v931
        %v933 = vpop.f32.mrb[0].mxu0
        %934 = vmatprep.mubr.f32.mxu0 0.0
        %935 = vmatmul.mubr.f32.gmra.mrb[0].mxu0 %v853
        %v936 = vpop.f32.mrb[0].mxu0
        %v937 = vadd.f32 %v840, %v936
        %v938 = vpop.f32.mrb[0].mxu0
        %939 = vdwg.mxu0
        %v940 = vtanh.pop %v922
        %v941 = vtanh.pop %v927
        %v942 = vtanh.pop %v932
        %v943 = vtanh.pop %v937
        %v944 = vld [vmem:[%s5] sm:$0xff]
        %v945 = vld [vmem:[%s5 + $0x8] sm:$0xff]
        %v946 = vld [vmem:[%s5 + $0x10] sm:$0xff]
        %v947 = vld [vmem:[%s5 + $0x18] sm:$0xff]
        %949 = vset.pattern.permute.xlu0 0
        %950 = vperm.xlu0 %949, %v944
        %v951 = vpop.permute.xlu0 %950
        %954 = vset.pattern.permute.xlu0 0
        %955 = vperm.xlu0 %954, %v945
        %v956 = vpop.permute.xlu0 %955
        %959 = vset.pattern.permute.xlu0 0
        %960 = vperm.xlu0 %959, %v946
        %v961 = vpop.permute.xlu0 %960
        %964 = vset.pattern.permute.xlu0 0
        %965 = vperm.xlu0 %964, %v947
        %v966 = vpop.permute.xlu0 %965
        %v968 = vmul.f32 %v951, %v940
        %v969 = vmul.f32 %v956, %v941
        %v970 = vmul.f32 %v961, %v942
        %v971 = vmul.f32 %v966, %v943
        %v972 = vadd.f32 %v968, %v969
        %v973 = vadd.f32 %v972, %v970
        %v974 = vadd.f32 %v973, %v971
        %v975 = vrot.slane %v974, 4
        %v976 = vadd.f32 %v974, %v975
        %v977 = vrot.slane %v976, 2
        %v978 = vadd.f32 %v976, %v977
        %v979 = vrot.slane %v978, 1
        %v980 = vadd.f32 %v978, %v979
        %v981 = vld [vmem:[#allocation2] sm:$0x1]
        %983 = vset.pattern.permute.xlu0 0
        %984 = vperm.xlu0 %983, %v981
        %v985 = vpop.permute.xlu0 %984
        %v987 = vlaneseq
        %v988 = vshrl.u32 %v987, 7
        %v989 = vsub.s32 0, %v988
        %v990 = vrot.slane %v985, %v989
        %v991 = vadd.f32 %v980, %v990
        %v992 = vxor.u32 %v991, 2147483648
        %v993 = vmul.f32 %v992, 1.442695
        %v994 = vpow.pop %v993
        %v995 = vadd.f32 %v994, 1.0
        %v996 = vrcp.pop %v995
        %v997 = vmul.f32 1.0, %v996
        %998 = vst [vmem:[%s270] sm:$0x1] %v997
        %s999 = sand.u32 %s183, 1
        %s1000 = scalar_lea.sflag [#allocation4], %s999
        %s1001 = sand.u32 %s183, 1
        %s1002 = scalar_lea.vmem [#allocation3], %s1001
        // Predicated region
        $region49: #{tpu_custom_call.1} parent=47 // pred_check
          %p1003 = pneg %p193
        $region50: #{tpu_custom_call.1} parent=47 // pred_check_branch
          %1005 = sbr.rel (%p1003) target = $region52
        $region51: #{tpu_custom_call.1} parent=47 // pred_region
          %s1007 = ssub.s32 16, 16
          %1008 = vsyncadd %s1000, %s1007
          %s1009 = smul.addr %s23, 16
          %s1010 = scalar_lea.hbm %s7, %s1009
          %s1012 = sshll.u32 %s1002, 4
          %s1013 = int_to_ptr.vmem [resolvable:$true] %s1012
          %1015 = dma.vmem_to_hbm [thread:$0]  %s1013, 16, %s1010, %s1000
        $region52: #{tpu_custom_call.1} parent=47 // pred_fallthru
          _
      $region48: #{tpu_custom_call.1} parent=5 // pred_fallthru
        _
      %p1016 = scmp.le.s32.totalorder 2, %s18
      // Predicated region
      $region53: #{tpu_custom_call.1} parent=5 // pred_check
        %p1017 = pneg %p1016
      $region54: #{tpu_custom_call.1} parent=5 // pred_check_branch
        %1019 = sbr.rel (%p1017) target = $region56
      $region55: #{tpu_custom_call.1} parent=5 // pred_region
        %s1020 = ssub.s32 %s18, 2
        // Predicated region
        $region57: #{tpu_custom_call.1} parent=55 // pred_check
          %p1021 = pneg %p199
        $region58: #{tpu_custom_call.1} parent=55 // pred_check_branch
          %1023 = sbr.rel (%p1021) target = $region60
        $region59: #{tpu_custom_call.1} parent=55 // pred_region
          %s1024 = sand.u32 %s184, 1
          %s1025 = scalar_lea.sflag [#allocation4], %s1024
          %s1026 = sand.u32 %s184, 1
          %s1027 = scalar_lea.vmem [#allocation3], %s1026
          %1028 = dma.done %s1025, 16
        $region60: #{tpu_custom_call.1} parent=55 // pred_fallthru
          _
      $region56: #{tpu_custom_call.1} parent=5 // pred_fallthru
        _
    $region6: #{tpu_custom_call.1} parent=1 // loop_footer
      %s22 = sadd.s32 1, %s18
    $region7: #{tpu_custom_call.1} parent=1 // loop_footer_branch
      %17 = sbr.rel target = $region3
    $region8: #{tpu_custom_call.1} parent=1 // loop_exit
      _
    %1029 = vsyncpa [#allocation4], 1
    %s1030 = scalar_lea.sflag [#allocation4], 1
    %1031 = vsyncpa %s1030, 1

</llo_original>
